<compile_context>
chip_gen: v6e
topology: v6e:2x2x1
jax: 0.10.0
libtpu: 0.0.40
codegen_flags: <defaults>
</compile_context>

<pallas_src>
import jax
import jax.numpy as jnp
from jax.experimental import pallas as pl
from jax.experimental.pallas import tpu as pltpu

NEG_INF = -1e20  # parlai neginf for float32


def _round_up(x, m):
    return (x + m - 1) // m * m


def _vmem_capacity_bytes():
    try:
        return int(pltpu.get_tpu_info().vmem_capacity_bytes)
    except Exception:
        return 64 * 1024 * 1024  # conservative fallback: v7x has 64 MiB / TensorCore


def hop_kernel(q_ref, in_mem_ref, out_mem_ref, bias_ref, wt_ref, o_ref):
    # q_ref:       (TB, E)
    # in_mem_ref:  (TB, E, M)
    # out_mem_ref: (TB, M, E)
    # bias_ref:    (TB, M)  float additive mask bias (0 or -1e20)
    # wt_ref:      (E, E)   rotate_w.T, resident in VMEM across all grid steps
    # o_ref:       (TB, E)
    q = q_ref[...].astype(jnp.float32)

    # 1) attention scores: VPU broadcast-multiply + reduce over E (no per-row MXU matmul)
    in_mem = in_mem_ref[...].astype(jnp.float32)                 # (TB, E, M)
    attn = jnp.sum(q[:, :, None] * in_mem, axis=1)               # (TB, M)
    attn = attn + bias_ref[...]                                  # mask padded memories

    # 2) softmax over memories (row-wise lane reductions)
    m = jnp.max(attn, axis=-1, keepdims=True)
    e = jnp.exp(attn - m)
    denom = jnp.sum(e, axis=-1, keepdims=True)
    inv = pl.reciprocal(denom, approx=True)                      # EUP vrcp seed
    inv = inv * (2.0 - denom * inv)                              # one Newton step (cheap VPU)
    probs = e * inv                                              # (TB, M)

    # 3) attention-weighted sum of output memories: broadcast-multiply + reduce over M
    out_mem = out_mem_ref[...].astype(jnp.float32)               # (TB, M, E)
    mem_out = jnp.sum(probs[:, :, None] * out_mem, axis=1)       # (TB, E)

    # 4) rotation fused in-kernel: one (TB,E) @ (E,E) matmul on the otherwise-idle MXU
    rot = jnp.dot(q, wt_ref[...].astype(jnp.float32),
                  preferred_element_type=jnp.float32)            # (TB, E)

    o_ref[...] = (mem_out + rot).astype(o_ref.dtype)


def hop_forward(query_embs, in_mem_embs, out_mem_embs, pad_mask, rotate_w=None,
                *, mem_dtype=None, tile_vmem_budget_bytes=None):
    bsz, esz = query_embs.shape
    num_mems = in_mem_embs.shape[2]
    out_dtype = query_embs.dtype

    # Optional narrower memory dtype (e.g. bf16 on v5e): halves the dominant HBM
    # traffic; the kernel accumulates in f32 regardless.
    if mem_dtype is not None:
        in_mem_embs = in_mem_embs.astype(mem_dtype)
        out_mem_embs = out_mem_embs.astype(mem_dtype)

    # rotation weight, pre-transposed so the kernel computes q @ W.T
    if rotate_w is None:
        wt = jnp.eye(esz, dtype=out_dtype)        # rotate=False -> identity rotation
    else:
        wt = jnp.asarray(rotate_w).T

    # additive float mask bias (no bool/int path inside the kernel)
    if pad_mask is None:
        bias = jnp.zeros((bsz, num_mems), dtype=jnp.float32)
    else:
        bias = jnp.where(pad_mask, jnp.float32(NEG_INF), jnp.float32(0.0))

    # ---- padding-aware VMEM footprint -> batch tile size --------------------
    q_item = jnp.dtype(query_embs.dtype).itemsize
    m_item = jnp.dtype(in_mem_embs.dtype).itemsize
    o_item = jnp.dtype(out_dtype).itemsize
    w_item = jnp.dtype(wt.dtype).itemsize
    e_lane = _round_up(esz, 128)
    e_sub = _round_up(esz, 8)
    m_lane = _round_up(num_mems, 128)
    m_sub = _round_up(num_mems, 8)

    # bytes per batch row inside VMEM ((8,128)-tile padded), x2 for double buffering
    per_row = 2 * (e_lane * q_item                 # q       (TB, E)
                   + e_sub * m_lane * m_item       # in_mem  (TB, E, M)
                   + m_sub * e_lane * m_item       # out_mem (TB, M, E)
                   + m_lane * 4                    # bias    (TB, M) f32
                   + e_lane * o_item)              # out     (TB, E)
    wt_bytes = 2 * e_sub * e_lane * w_item         # resident rotation weight

    vmem_cap = _vmem_capacity_bytes()
    if tile_vmem_budget_bytes is None:
        # scale with the chip: v7x (64 MiB/TC) -> ~40 MiB; v5e/v6e (128 MiB) -> ~88 MiB
        tile_vmem_budget_bytes = int(vmem_cap * 0.75) - 8 * 1024 * 1024
    tb_budget = max(1, int((tile_vmem_budget_bytes - wt_bytes) // per_row))

    # ---- batch tile: multiple of 8 (dense sublanes), >=2 tiles when bsz >= 16
    # (keeps both v7x TensorCores busy on the "parallel" axis). No jnp.pad of the
    # big memory tensors: a ragged trailing block is handled by Pallas.
    if tb_budget >= bsz and bsz < 16:
        tb = bsz
    else:
        cap = tb_budget
        if bsz >= 16:
            cap = min(cap, pl.cdiv(bsz, 2))        # at least 2 grid tiles
        tb = max(8, (cap // 8) * 8)
        if tb >= bsz:
            tb = bsz
    n_tiles = pl.cdiv(bsz, tb)

    # actual double-buffered footprint of the chosen tile -> vmem limit (+ headroom)
    tb_sub = _round_up(tb, 8)
    tile_bytes = 2 * (tb_sub * e_lane * q_item
                      + tb * e_sub * m_lane * m_item
                      + tb * m_sub * e_lane * m_item
                      + tb_sub * m_lane * 4
                      + tb_sub * e_lane * o_item) + wt_bytes
    vmem_limit = int(min(vmem_cap,
                         max(tile_bytes + 8 * 1024 * 1024, 16 * 1024 * 1024)))

    out = pl.pallas_call(
        hop_kernel,
        out_shape=jax.ShapeDtypeStruct((bsz, esz), out_dtype),
        grid=(n_tiles,),
        in_specs=[
            pl.BlockSpec((tb, esz), lambda i: (i, 0)),               # q
            pl.BlockSpec((tb, esz, num_mems), lambda i: (i, 0, 0)),  # in_mem
            pl.BlockSpec((tb, num_mems, esz), lambda i: (i, 0, 0)),  # out_mem
            pl.BlockSpec((tb, num_mems), lambda i: (i, 0)),          # bias
            pl.BlockSpec((esz, esz), lambda i: (0, 0)),              # W.T (VMEM resident)
        ],
        out_specs=pl.BlockSpec((tb, esz), lambda i: (i, 0)),
        compiler_params=pltpu.CompilerParams(
            dimension_semantics=("parallel",),   # shard batch tiles across TCs (v7x)
            vmem_limit_bytes=vmem_limit,
        ),
    )(query_embs, in_mem_embs, out_mem_embs, bias, wt)

    return out


def hop_ref(query_embs, in_mem_embs, out_mem_embs, pad_mask, rotate_w):
    """Pure-JAX reference reproducing the PyTorch forward."""
    attn = jnp.einsum('be,bem->bm', query_embs, in_mem_embs)
    if pad_mask is not None:
        attn = jnp.where(pad_mask, jnp.float32(NEG_INF), attn)
    probs = jax.nn.softmax(attn, axis=1)
    mem_out = jnp.einsum('bm,bme->be', probs, out_mem_embs)
    rot = query_embs if rotate_w is None else query_embs @ rotate_w.T
    return mem_out + rot


if __name__ == "__main__":
    esz, num_mems = 32, 16
    key = jax.random.PRNGKey(0)
    k0, k1, k2, k_w = jax.random.split(key, 4)

    # nn.Linear(esz, esz, bias=False) weight, default init U(-1/sqrt(esz), 1/sqrt(esz))
    bound = 1.0 / (esz ** 0.5)
    rotate_w = jax.random.uniform(k_w, (esz, esz), jnp.float32,
                                  minval=-bound, maxval=bound)

    def make_inputs(k, bsz):
        kq, ki, ko, km = jax.random.split(k, 4)
        q = jax.random.normal(kq, (bsz, esz), dtype=jnp.float32)
        im = jax.random.normal(ki, (bsz, esz, num_mems), dtype=jnp.float32)
        om = jax.random.normal(ko, (bsz, num_mems, esz), dtype=jnp.float32)
        pm = jax.random.bernoulli(km, 0.3, (bsz, num_mems))
        pm = pm.at[:, 0].set(False)     # at least one valid memory per row
        return q, im, om, pm

    # 1) tiny batch -> single full-batch tile
    q, im, om, pm = make_inputs(k0, 2)
    out = jax.block_until_ready(hop_forward(q, im, om, pm, rotate_w))
    ref = hop_ref(q, im, om, pm, rotate_w)
    assert out.shape == (2, esz)
    assert jnp.allclose(out, ref, rtol=1e-4, atol=1e-4), "mismatch vs reference (bsz=2)"

    # 2) bsz=24 -> >=2-tiles rule: 3 tiles of TB=8, exercises the multi-tile grid
    q, im, om, pm = make_inputs(k1, 24)
    out = jax.block_until_ready(hop_forward(q, im, om, pm, rotate_w))
    ref = hop_ref(q, im, om, pm, rotate_w)
    assert jnp.allclose(out, ref, rtol=1e-4, atol=1e-4), "mismatch vs reference (bsz=24)"

    # 3) bsz=20 -> ragged trailing block (tiles 8,8,4) with no jnp.pad copies
    q, im, om, pm = make_inputs(k2, 20)
    out = jax.block_until_ready(hop_forward(q, im, om, pm, rotate_w))
    ref = hop_ref(q, im, om, pm, rotate_w)
    assert jnp.allclose(out, ref, rtol=1e-4, atol=1e-4), "mismatch vs reference (bsz=20)"

    print("KERNEL_OK")
</pallas_src>

<mosaic_0001>
module attributes {stable_mosaic.version = 11 : i64} {
  func.func @hop_kernel(%arg0: i32, %arg1: memref<2x32xf32, #tpu.memory_space<vmem>>, %arg2: memref<2x32x16xf32, #tpu.memory_space<vmem>>, %arg3: memref<2x16x32xf32, #tpu.memory_space<vmem>>, %arg4: memref<2x16xf32, #tpu.memory_space<vmem>>, %arg5: memref<32x32xf32, #tpu.memory_space<vmem>>, %arg6: memref<2x32xf32, #tpu.memory_space<vmem>>) attributes {dimension_semantics = [#tpu.dimension_semantics<parallel>], iteration_bounds = array<i64: 1>, scalar_prefetch = 0 : i64, scratch_operands = 0 : i64, tpu.core_type = #tpu.core_type<tc>, window_params = [{transform_indices = @transform_0, window_bounds = array<i64: 2, 32>}, {transform_indices = @transform_1, window_bounds = array<i64: 2, 32, 16>}, {transform_indices = @transform_2, window_bounds = array<i64: 2, 16, 32>}, {transform_indices = @transform_3, window_bounds = array<i64: 2, 16>}, {pipeline_mode = #tpu.pipeline_mode<synchronous>, transform_indices = @transform_4, window_bounds = array<i64: 32, 32>}, {transform_indices = @transform_5, window_bounds = array<i64: 2, 32>}]} {
    %c0 = arith.constant 0 : index
    %c0_0 = arith.constant 0 : index
    %0 = vector.load %arg1[%c0, %c0_0] : memref<2x32xf32, #tpu.memory_space<vmem>>, vector<2x32xf32>
    %c0_1 = arith.constant 0 : index
    %c0_2 = arith.constant 0 : index
    %c0_3 = arith.constant 0 : index
    %1 = vector.load %arg2[%c0_1, %c0_2, %c0_3] : memref<2x32x16xf32, #tpu.memory_space<vmem>>, vector<2x32x16xf32>
    %2 = vector.shape_cast %0 : vector<2x32xf32> to vector<2x32x1xf32>
    %3 = vector.broadcast %2 : vector<2x32x1xf32> to vector<2x32x16xf32>
    %4 = arith.mulf %3, %1 : vector<2x32x16xf32>
    %cst = arith.constant dense<0.000000e+00> : vector<2x16xf32>
    %5 = vector.multi_reduction <add>, %4, %cst [1] : vector<2x32x16xf32> to vector<2x16xf32>
    %c0_4 = arith.constant 0 : index
    %c0_5 = arith.constant 0 : index
    %6 = vector.load %arg4[%c0_4, %c0_5] : memref<2x16xf32, #tpu.memory_space<vmem>>, vector<2x16xf32>
    %7 = arith.addf %5, %6 : vector<2x16xf32>
    %cst_6 = arith.constant dense<0xFF800000> : vector<2xf32>
    %8 = vector.multi_reduction <maximumf>, %7, %cst_6 [1] : vector<2x16xf32> to vector<2xf32>
    %9 = vector.shape_cast %8 : vector<2xf32> to vector<2x1xf32>
    %10 = vector.broadcast %9 : vector<2x1xf32> to vector<2x16xf32>
    %11 = arith.subf %7, %10 : vector<2x16xf32>
    %12 = math.exp %11 : vector<2x16xf32>
    %cst_7 = arith.constant dense<0.000000e+00> : vector<2xf32>
    %13 = vector.multi_reduction <add>, %12, %cst_7 [1] : vector<2x16xf32> to vector<2xf32>
    %14 = vector.shape_cast %13 : vector<2xf32> to vector<2x1xf32>
    %15 = tpu.reciprocal %14 {approx = true} : vector<2x1xf32> -> vector<2x1xf32>
    %16 = arith.mulf %14, %15 : vector<2x1xf32>
    %cst_8 = arith.constant 2.000000e+00 : f32
    %17 = vector.broadcast %cst_8 : f32 to vector<2x1xf32>
    %18 = arith.subf %17, %16 : vector<2x1xf32>
    %19 = arith.mulf %15, %18 : vector<2x1xf32>
    %20 = vector.broadcast %19 : vector<2x1xf32> to vector<2x16xf32>
    %21 = arith.mulf %12, %20 : vector<2x16xf32>
    %c0_9 = arith.constant 0 : index
    %c0_10 = arith.constant 0 : index
    %c0_11 = arith.constant 0 : index
    %22 = vector.load %arg3[%c0_9, %c0_10, %c0_11] : memref<2x16x32xf32, #tpu.memory_space<vmem>>, vector<2x16x32xf32>
    %23 = vector.shape_cast %21 : vector<2x16xf32> to vector<2x16x1xf32>
    %24 = vector.broadcast %23 : vector<2x16x1xf32> to vector<2x16x32xf32>
    %25 = arith.mulf %24, %22 : vector<2x16x32xf32>
    %cst_12 = arith.constant dense<0.000000e+00> : vector<2x32xf32>
    %26 = vector.multi_reduction <add>, %25, %cst_12 [1] : vector<2x16x32xf32> to vector<2x32xf32>
    %c0_13 = arith.constant 0 : index
    %c0_14 = arith.constant 0 : index
    %27 = vector.load %arg5[%c0_13, %c0_14] : memref<32x32xf32, #tpu.memory_space<vmem>>, vector<32x32xf32>
    %cst_15 = arith.constant dense<0.000000e+00> : vector<2x32xf32>
    %28 = tpu.matmul %0, %27, %cst_15 {dimension_numbers = #tpu.dot_dimension_numbers<[1], [0], [0], [1], [0, 0, 1, 1], [], []>} : vector<2x32xf32>, vector<32x32xf32>, vector<2x32xf32> -> vector<2x32xf32>
    %29 = arith.addf %26, %28 : vector<2x32xf32>
    %c0_16 = arith.constant 0 : index
    %c0_17 = arith.constant 0 : index
    %30 = vector.load %arg6[%c0_16, %c0_17] : memref<2x32xf32, #tpu.memory_space<vmem>>, vector<2x32xf32>
    tpu.vector_store %arg6[%c0_16, %c0_17], %29 {strides = array<i32>} : memref<2x32xf32, #tpu.memory_space<vmem>>, vector<2x32xf32>,
    return
  }
  func.func @transform_0(%arg0: i32) -> (i32, i32) {
    %c0_i32 = arith.constant 0 : i32
    %c0_i32_0 = arith.constant 0 : i32
    return %arg0, %c0_i32 : i32, i32
  }
  func.func @transform_1(%arg0: i32) -> (i32, i32, i32) {
    %c0_i32 = arith.constant 0 : i32
    %c0_i32_0 = arith.constant 0 : i32
    %c0_i32_1 = arith.constant 0 : i32
    return %arg0, %c0_i32, %c0_i32_0 : i32, i32, i32
  }
  func.func @transform_2(%arg0: i32) -> (i32, i32, i32) {
    %c0_i32 = arith.constant 0 : i32
    %c0_i32_0 = arith.constant 0 : i32
    %c0_i32_1 = arith.constant 0 : i32
    return %arg0, %c0_i32, %c0_i32_0 : i32, i32, i32
  }
  func.func @transform_3(%arg0: i32) -> (i32, i32) {
    %c0_i32 = arith.constant 0 : i32
    %c0_i32_0 = arith.constant 0 : i32
    return %arg0, %c0_i32 : i32, i32
  }
  func.func @transform_4(%arg0: i32) -> (i32, i32) {
    %c0_i32 = arith.constant 0 : i32
    %c0_i32_0 = arith.constant 0 : i32
    %c0_i32_1 = arith.constant 0 : i32
    return %c0_i32, %c0_i32_0 : i32, i32
  }
  func.func @transform_5(%arg0: i32) -> (i32, i32) {
    %c0_i32 = arith.constant 0 : i32
    %c0_i32_0 = arith.constant 0 : i32
    return %arg0, %c0_i32 : i32, i32
  }
}

</mosaic_0001>

<llo_original>
// kernel: tpu_custom_call.1
$region0: #{tpu_custom_call.1}
  #allocation0 [shape = 'u32[]', space=smem, size = 0x4, offset = 0x4, fixed_abs, tag = 'smem constant byte address 0x4 - core index']
  #allocation1 [shape = 'u32[144,128]{1,0:T(1,128)}', space=vmem, size = 0x12000, scoped, tag = 'internal scratch']
  %s0 = inlined_call_operand.vmem [shape: f32[2,32], index: 0, kind: input, shape index: {}]
  %s1 = inlined_call_operand.vmem [shape: f32[2,32,16], index: 1, kind: input, shape index: {}]
  %s2 = inlined_call_operand.vmem [shape: f32[2,16,32], index: 2, kind: input, shape index: {}]
  %s3 = inlined_call_operand.vmem [shape: f32[2,16], index: 3, kind: input, shape index: {}]
  %s4 = inlined_call_operand.vmem [shape: f32[32,32], index: 4, kind: input, shape index: {}]
  %s5 = inlined_call_operand.hbm [shape: f32[2,32], index: 5, kind: output, shape index: {}]
  %s6 = sld [smem:[#allocation0]]
  $region30: #{tpu_custom_call.1} parent=0
    _
  %s8 = ssub.s32 1, %s6
  %s9 = scalar_select 0, %s8, %s6
  $region1: #{tpu_custom_call.1} parent=0
    #allocation2 [shape = 'u8[1024]{0}', space=vmem, size = 0x400, scoped, tag = 'output window, operand 0, single buffered']
    #allocation3 [shape = 's32[1]{0}', space=sflag, size = 0x4, scoped, tag = 'scoped memory for tpu_custom_call.1']
    %10 = vsyncpa [#allocation3], 0
    // Predicated region
    $region2: #{tpu_custom_call.1} parent=1 // pred_check
      _
    $region3: #{tpu_custom_call.1} parent=1 // pred_check_branch
      %12 = sbr.rel (0) target = $region5
    $region4: #{tpu_custom_call.1} parent=1 // pred_region
      _
    $region5: #{tpu_custom_call.1} parent=1 // pred_fallthru
      _
    // Predicated region
    $region6: #{tpu_custom_call.1} parent=1 // pred_check
      _
    $region7: #{tpu_custom_call.1} parent=1 // pred_check_branch
      %14 = sbr.rel (0) target = $region9
    $region8: #{tpu_custom_call.1} parent=1 // pred_region
      _
    $region9: #{tpu_custom_call.1} parent=1 // pred_fallthru
      _
    // Predicated region
    $region10: #{tpu_custom_call.1} parent=1 // pred_check
      _
    $region11: #{tpu_custom_call.1} parent=1 // pred_check_branch
      %16 = sbr.rel (0) target = $region13
    $region12: #{tpu_custom_call.1} parent=1 // pred_region
      _
    $region13: #{tpu_custom_call.1} parent=1 // pred_fallthru
      _
    // Predicated region
    $region14: #{tpu_custom_call.1} parent=1 // pred_check
      _
    $region15: #{tpu_custom_call.1} parent=1 // pred_check_branch
      %18 = sbr.rel (0) target = $region17
    $region16: #{tpu_custom_call.1} parent=1 // pred_region
      _
    $region17: #{tpu_custom_call.1} parent=1 // pred_fallthru
      _
    // Predicated region
    $region18: #{tpu_custom_call.1} parent=1 // pred_check
      _
    $region19: #{tpu_custom_call.1} parent=1 // pred_check_branch
      %20 = sbr.rel (0) target = $region21
    $region20: #{tpu_custom_call.1} parent=1 // pred_region
      _
    $region21: #{tpu_custom_call.1} parent=1 // pred_fallthru
      _
    %v21 = vld [vmem:[%s0] sm:$0x3]
    %v22 = vld [vmem:[%s1] sm:$0xff]
    %v23 = vld [vmem:[%s1 + $0x8] sm:$0xff]
    %v24 = vld [vmem:[%s1 + $0x10] sm:$0xff]
    %v25 = vld [vmem:[%s1 + $0x18] sm:$0xff]
    %v26 = vld [vmem:[%s1 + $0x20] sm:$0xff]
    %v27 = vld [vmem:[%s1 + $0x28] sm:$0xff]
    %v28 = vld [vmem:[%s1 + $0x30] sm:$0xff]
    %v29 = vld [vmem:[%s1 + $0x38] sm:$0xff]
    %v30 = vlaneseq
    %v31 = vshrl.u32 %v30, 7
    %v32 = vsub.s32 0, %v31
    %v33 = vrot.slane %v21, %v32
    %35 = vbcast.lane.b32.xlu0 %v33, 256
    %v36 = vpop.permute.xlu0 %35
    %s38 = sor.u32 256, 8
    %39 = vbcast.lane.b32.xlu0 %v33, %s38
    %v40 = vpop.permute.xlu0 %39
    %s42 = sor.u32 256, 16
    %43 = vbcast.lane.b32.xlu0 %v33, %s42
    %v44 = vpop.permute.xlu0 %43
    %s46 = sor.u32 256, 24
    %47 = vbcast.lane.b32.xlu0 %v33, %s46
    %v48 = vpop.permute.xlu0 %47
    %v49 = vlaneseq
    %v50 = vshrl.u32 %v49, 7
    %v51 = vsub.s32 1, %v50
    %v52 = vrot.slane %v21, %v51
    %54 = vbcast.lane.b32.xlu0 %v52, 256
    %v55 = vpop.permute.xlu0 %54
    %s57 = sor.u32 256, 8
    %58 = vbcast.lane.b32.xlu0 %v52, %s57
    %v59 = vpop.permute.xlu0 %58
    %s61 = sor.u32 256, 16
    %62 = vbcast.lane.b32.xlu0 %v52, %s61
    %v63 = vpop.permute.xlu0 %62
    %s65 = sor.u32 256, 24
    %66 = vbcast.lane.b32.xlu0 %v52, %s65
    %v67 = vpop.permute.xlu0 %66
    %v68 = vmul.f32 %v36, %v22
    %v69 = vmul.f32 %v40, %v23
    %v70 = vmul.f32 %v44, %v24
    %v71 = vmul.f32 %v48, %v25
    %v72 = vmul.f32 %v55, %v26
    %v73 = vmul.f32 %v59, %v27
    %v74 = vmul.f32 %v63, %v28
    %v75 = vmul.f32 %v67, %v29
    %vm76 = vcmask 130048
    %v77 = vsel %vm76, %v68, 0.0
    %v78 = vsel %vm76, %v69, 0.0
    %v79 = vadd.f32 %v77, %v78
    %v80 = vsel %vm76, %v70, 0.0
    %v81 = vadd.f32 %v79, %v80
    %v82 = vsel %vm76, %v71, 0.0
    %v83 = vadd.f32 %v81, %v82
    %v84 = vrot.slane %v83, 4
    %v85 = vadd.f32 %v83, %v84
    %v86 = vrot.slane %v85, 2
    %v87 = vadd.f32 %v85, %v86
    %v88 = vrot.slane %v87, 1
    %v89 = vadd.f32 %v87, %v88
    %v90 = vsel %vm76, %v72, 0.0
    %v91 = vsel %vm76, %v73, 0.0
    %v92 = vadd.f32 %v90, %v91
    %v93 = vsel %vm76, %v74, 0.0
    %v94 = vadd.f32 %v92, %v93
    %v95 = vsel %vm76, %v75, 0.0
    %v96 = vadd.f32 %v94, %v95
    %v97 = vrot.slane %v96, 4
    %v98 = vadd.f32 %v96, %v97
    %v99 = vrot.slane %v98, 2
    %v100 = vadd.f32 %v98, %v99
    %v101 = vrot.slane %v100, 1
    %v102 = vadd.f32 %v100, %v101
    %v103 = vld [vmem:[%s3] sm:$0x3]
    %v105 = vrot.slane %v103, 1
    %v108 = vadd.f32 %v89, %v103
    %v109 = vadd.f32 %v102, %v105
    %v112 = vrot.slane %v109, 7
    %vm113 = vcmask 1041409
    %v114 = vsel %vm113, %v112, %v108
    %vm116 = vcmask 123904
    %v117 = vsel %vm116, %v114, -inf
    %118 = vmax.xlane.f32.xlu0 %v117
    %v119 = vpop.xlane.xlu0 %118
    %v121 = vrot.slane %v119, 1
    %v124 = vsub.f32 %v108, %v119
    %v125 = vsub.f32 %v109, %v121
    %v126 = vmul.f32 %v124, 1.442695
    %v127 = vpow.pop %v126
    %v128 = vmul.f32 %v125, 1.442695
    %v129 = vpow.pop %v128
    %v132 = vrot.slane %v129, 7
    %v133 = vsel %vm113, %v132, %v127
    %v135 = vsel %vm116, %v133, 0.0
    %136 = vadd.xlane.f32.xlu0 %v135
    %v137 = vpop.xlane.xlu0 %136
    %v138 = vrcp.pop %v137
    %v139 = vmul.f32 %v137, %v138
    %v140 = vsub.f32 2.0, %v139
    %v141 = vmul.f32 %v138, %v140
    %v143 = vrot.slane %v141, 1
    %v146 = vmul.f32 %v127, %v141
    %v147 = vmul.f32 %v129, %v143
    %v148 = vld [vmem:[%s2] sm:$0xff]
    %v149 = vld [vmem:[%s2 + $0x8] sm:$0xff]
    %v150 = vld [vmem:[%s2 + $0x10] sm:$0xff]
    %v151 = vld [vmem:[%s2 + $0x18] sm:$0xff]
    %v152 = vlaneseq
    %v153 = vshrl.u32 %v152, 7
    %v154 = vsub.s32 0, %v153
    %v155 = vrot.slane %v146, %v154
    %157 = vbcast.lane.b32.xlu0 %v155, 256
    %v158 = vpop.permute.xlu0 %157
    %s160 = sor.u32 256, 8
    %161 = vbcast.lane.b32.xlu0 %v155, %s160
    %v162 = vpop.permute.xlu0 %161
    %v163 = vlaneseq
    %v164 = vshrl.u32 %v163, 7
    %v165 = vsub.s32 0, %v164
    %v166 = vrot.slane %v147, %v165
    %168 = vbcast.lane.b32.xlu0 %v166, 256
    %v169 = vpop.permute.xlu0 %168
    %s171 = sor.u32 256, 8
    %172 = vbcast.lane.b32.xlu0 %v166, %s171
    %v173 = vpop.permute.xlu0 %172
    %v174 = vmul.f32 %v158, %v148
    %v175 = vmul.f32 %v162, %v149
    %v176 = vmul.f32 %v169, %v150
    %v177 = vmul.f32 %v173, %v151
    %vm178 = vcmask 261120
    %v179 = vsel %vm178, %v174, 0.0
    %v180 = vsel %vm178, %v175, 0.0
    %v181 = vadd.f32 %v179, %v180
    %v182 = vrot.slane %v181, 4
    %v183 = vadd.f32 %v181, %v182
    %v184 = vrot.slane %v183, 2
    %v185 = vadd.f32 %v183, %v184
    %v186 = vrot.slane %v185, 1
    %v187 = vadd.f32 %v185, %v186
    %v188 = vsel %vm178, %v176, 0.0
    %v189 = vsel %vm178, %v177, 0.0
    %v190 = vadd.f32 %v188, %v189
    %v191 = vrot.slane %v190, 4
    %v192 = vadd.f32 %v190, %v191
    %v193 = vrot.slane %v192, 2
    %v194 = vadd.f32 %v192, %v193
    %v195 = vrot.slane %v194, 1
    %v196 = vadd.f32 %v194, %v195
    %v197 = vld [vmem:[%s4] sm:$0xff]
    %v198 = vld [vmem:[%s4 + $0x8] sm:$0xff]
    %v199 = vld [vmem:[%s4 + $0x10] sm:$0xff]
    %v200 = vld [vmem:[%s4 + $0x18] sm:$0xff]
    %v202 = vsel %vm178, %v21, 0
    %204 = vmatprep.subr.mxu0 0.0
    %205 = vmatpush1.msra.mxu0 0.0
    %206 = vmatprep.subr.mxu0 0.0
    %207 = vmatpush1.msra.mxu0 0.0
    %208 = vmatprep.subr.mxu0 0.0
    %209 = vmatpush1.msra.mxu0 0.0
    %210 = vmatprep.subr.mxu0 0.0
    %211 = vmatpush1.msra.mxu0 0.0
    %212 = vmatprep.subr.mxu0 0.0
    %213 = vmatpush1.msra.mxu0 0.0
    %214 = vmatprep.subr.mxu0 0.0
    %215 = vmatpush1.msra.mxu0 0.0
    %216 = vmatprep.subr.mxu0 0.0
    %217 = vmatpush1.msra.mxu0 0.0
    %218 = vmatprep.subr.mxu0 0.0
    %219 = vmatpush1.msra.mxu0 0.0
    %220 = vmatprep.subr.mxu0 0.0
    %221 = vmatpush1.msra.mxu0 0.0
    %222 = vmatprep.subr.mxu0 0.0
    %223 = vmatpush1.msra.mxu0 0.0
    %224 = vmatprep.subr.mxu0 0.0
    %225 = vmatpush1.msra.mxu0 0.0
    %226 = vmatprep.subr.mxu0 0.0
    %227 = vmatpush1.msra.mxu0 0.0
    %228 = vmatprep.subr.mxu0 0.0
    %229 = vmatpush1.msra.mxu0 %v200
    %230 = vmatprep.subr.mxu0 0.0
    %231 = vmatpush1.msra.mxu0 %v199
    %232 = vmatprep.subr.mxu0 0.0
    %233 = vmatpush1.msra.mxu0 %v198
    %234 = vmatprep.subr.mxu0 0.0
    %235 = vmatpush1.msra.mxu0 %v197
    %236 = vmatprep.subr.mxu0 0.0
    %237 = vmatpush2.msra.mxu0 0.0
    %238 = vmatprep.subr.mxu0 0.0
    %239 = vmatpush2.msra.mxu0 0.0
    %240 = vmatprep.subr.mxu0 0.0
    %241 = vmatpush2.msra.mxu0 0.0
    %242 = vmatprep.subr.mxu0 0.0
    %243 = vmatpush2.msra.mxu0 0.0
    %244 = vmatprep.subr.mxu0 0.0
    %245 = vmatpush2.msra.mxu0 0.0
    %246 = vmatprep.subr.mxu0 0.0
    %247 = vmatpush2.msra.mxu0 0.0
    %248 = vmatprep.subr.mxu0 0.0
    %249 = vmatpush2.msra.mxu0 0.0
    %250 = vmatprep.subr.mxu0 0.0
    %251 = vmatpush2.msra.mxu0 0.0
    %252 = vmatprep.subr.mxu0 0.0
    %253 = vmatpush2.msra.mxu0 0.0
    %254 = vmatprep.subr.mxu0 0.0
    %255 = vmatpush2.msra.mxu0 0.0
    %256 = vmatprep.subr.mxu0 0.0
    %257 = vmatpush2.msra.mxu0 0.0
    %258 = vmatprep.subr.mxu0 0.0
    %259 = vmatpush2.msra.mxu0 0.0
    %260 = vmatprep.subr.mxu0 0.0
    %261 = vmatpush2.msra.mxu0 0.0
    %262 = vmatprep.subr.mxu0 0.0
    %263 = vmatpush2.msra.mxu0 0.0
    %264 = vmatprep.subr.mxu0 0.0
    %265 = vmatpush2.msra.mxu0 0.0
    %266 = vmatprep.subr.mxu0 0.0
    %267 = vmatpush2.msra.mxu0 0.0
    %268 = vmatprep.mubr.f32.mxu0 0.0
    %269 = vmatmul.mubr.f32.gmra.mxu0 %v202
    %v270 = vpop.f32.mrf.mxu0
    %v271 = vadd.f32 0.0, %v270
    %v272 = vpop.f32.mrf.mxu0
    %273 = vdwg.mxu0
    %v275 = vrot.slane %v271, 1
    %v278 = vadd.f32 %v187, %v271
    %v279 = vadd.f32 %v196, %v275
    %v282 = vrot.slane %v279, 7
    %v283 = vsel %vm113, %v282, %v278
    %vm285 = vcmask 254976
    %286 = vst.msk [vmem:[#allocation2] sm:$0x3] %vm285, %v283
    // Predicated region
    $region22: #{tpu_custom_call.1} parent=1 // pred_check
      _
    $region23: #{tpu_custom_call.1} parent=1 // pred_check_branch
      %288 = sbr.rel (0) target = $region25
    $region24: #{tpu_custom_call.1} parent=1 // pred_region
      %s290 = ssub.s32 32, 32
      %291 = vsyncadd [#allocation3], %s290
      %s293 = sshll.u32 [#allocation2], 4
      %s294 = int_to_ptr.vmem [resolvable:$true] %s293
      %296 = dma.vmem_to_hbm [thread:$0]  %s294, 32, %s5, [#allocation3]
    $region25: #{tpu_custom_call.1} parent=1 // pred_fallthru
      _
    // Predicated region
    $region26: #{tpu_custom_call.1} parent=1 // pred_check
      _
    $region27: #{tpu_custom_call.1} parent=1 // pred_check_branch
      %298 = sbr.rel (0) target = $region29
    $region28: #{tpu_custom_call.1} parent=1 // pred_region
      %299 = dma.done [#allocation3], 32
    $region29: #{tpu_custom_call.1} parent=1 // pred_fallthru
      _
    %300 = vsyncpa [#allocation3], 1

</llo_original>
